<compile_context>
chip_gen: v7x
topology: tpu7x:2x2x1
jax: 0.10.0
libtpu: 0.0.40
codegen_flags: <defaults>
</compile_context>

<pallas_src>
import functools

import jax
import jax.numpy as jnp
from jax.experimental import pallas as pl
from jax.experimental.pallas import tpu as pltpu


def _round_up(x, m):
    return (x + m - 1) // m * m


def _conv1x1_nchw_to_nhwc_kernel(x_ref, w_ref, b_ref, o_ref, *,
                                 chunk, n_chunks, c_out):
    # x_ref: (1, C_in, t_hw)      -- spatial positions on the lane axis
    # w_ref: (C_out_pad, C_in)    -- constant index map -> resident in VMEM
    # b_ref: (C_out_pad, 1)
    # o_ref: (1, t_hw, C_out)     -- channel-last (NHWC) output tile
    w = w_ref[...]
    b = b_ref[...]

    def body(ci, carry):
        off = pl.multiple_of(ci * chunk, 128)
        x_chunk = x_ref[0, :, pl.ds(off, chunk)]                # (C_in, chunk)
        acc = jnp.dot(w, x_chunk,
                      preferred_element_type=jnp.float32)       # (C_out_pad, chunk)
        acc = acc + b
        y = jnp.transpose(acc, (1, 0))                          # (chunk, C_out_pad)
        o_ref[0, pl.ds(off, chunk), :] = y[:, :c_out].astype(o_ref.dtype)
        return carry

    jax.lax.fori_loop(0, n_chunks, body, 0, unroll=True)


@functools.partial(jax.jit, static_argnames=("num_anchors", "tile_hw"))
def hpe_head_forward(x_nchw, weight, bias, *, num_anchors=3, tile_hw=16384):
    """Pallas implementation of HPEHead.forward.

    Args:
      x_nchw:  (N, C_in, H, W) float32  -- PyTorch-style NCHW input.
      weight:  (C_out, C_in) float32    -- 1x1 conv weight (kernel dims squeezed).
      bias:    (C_out,) float32
    Returns:
      (N, H*W*num_anchors, 6) float32
    """
    n, c_in, h, w = x_nchw.shape
    c_out = weight.shape[0]
    assert c_out == num_anchors * 6

    hw = h * w
    # Free reshape — keep the native NCHW layout, no activation transpose/pad.
    x_flat = x_nchw.reshape(n, c_in, hw)

    # Pad C_out to a multiple of 8 (weight/bias only) so the in-kernel
    # transpose source is sublane-aligned; padded rows are sliced off in-kernel.
    c_out_pad = _round_up(c_out, 8)
    if c_out_pad != c_out:
        weight = jnp.pad(weight, ((0, c_out_pad - c_out), (0, 0)))
        bias = jnp.pad(bias, ((0, c_out_pad - c_out),))
    b_col = bias.reshape(c_out_pad, 1)

    # --- Spatial tile selection (lane-dense, VMEM-budgeted) -----------------
    hw128 = _round_up(hw, 128)
    # Keep the double-buffered x block <= ~2 x 8 MiB of VMEM.
    cap = max(128, (8 * 1024 * 1024 // (4 * c_in)) // 128 * 128)
    t_hw = min(tile_hw, hw128, cap)
    if n == 1:
        # Ensure >= 2 spatial grid steps so both v7x TensorCores get work.
        t_hw = min(t_hw, max(128, _round_up((hw128 + 1) // 2, 128)))
    if t_hw >= 2048:
        chunk = 2048
        t_hw = (t_hw // chunk) * chunk
    else:
        chunk = t_hw
    n_chunks = t_hw // chunk

    grid = (n, pl.cdiv(hw, t_hw))  # ragged last spatial block is fine

    itemsize = 4
    flops = 2 * n * hw * c_in * c_out
    bytes_accessed = (n * c_in * hw + c_out_pad * c_in + c_out_pad
                      + n * hw * c_out) * itemsize

    kernel = functools.partial(_conv1x1_nchw_to_nhwc_kernel,
                               chunk=chunk, n_chunks=n_chunks, c_out=c_out)

    out_nhwc = pl.pallas_call(
        kernel,
        out_shape=jax.ShapeDtypeStruct((n, hw, c_out), x_nchw.dtype),
        grid_spec=pltpu.PrefetchScalarGridSpec(
            num_scalar_prefetch=0,
            grid=grid,
            in_specs=[
                pl.BlockSpec((1, c_in, t_hw), lambda i, j: (i, 0, j)),
                pl.BlockSpec((c_out_pad, c_in), lambda i, j: (0, 0)),
                pl.BlockSpec((c_out_pad, 1), lambda i, j: (0, 0)),
            ],
            out_specs=pl.BlockSpec((1, t_hw, c_out), lambda i, j: (i, j, 0)),
        ),
        compiler_params=pltpu.CompilerParams(
            dimension_semantics=("parallel", "parallel"),
            vmem_limit_bytes=32 * 1024 * 1024),
        cost_estimate=pl.CostEstimate(
            flops=flops, transcendentals=0, bytes_accessed=bytes_accessed),
    )(x_flat, weight, b_col)

    # (N, HW, A*6) -> (N, HW*A, 6) is a free (metadata-only) reshape.
    return out_nhwc.reshape(n, hw * num_anchors, 6)


if __name__ == "__main__":
    # Small shapes consistent with the module: batch=2, inchannels=32,
    # spatial=16x16, num_anchors=3 (=> C_out = 18).
    N, C_IN, H, W = 2, 32, 16, 16
    NUM_ANCHORS = 3
    C_OUT = NUM_ANCHORS * 6

    key = jax.random.PRNGKey(0)
    kx, kw, kb = jax.random.split(key, 3)

    x = jax.random.normal(kx, (N, C_IN, H, W), dtype=jnp.float32)
    # Deterministic parameter init (synthetic; mimics a small uniform init).
    fan_in = C_IN  # 1x1 kernel
    bound = 1.0 / jnp.sqrt(fan_in)
    weight = jax.random.uniform(kw, (C_OUT, C_IN), jnp.float32, -bound, bound)
    bias = jax.random.uniform(kb, (C_OUT,), jnp.float32, -bound, bound)

    out = hpe_head_forward(x, weight, bias, num_anchors=NUM_ANCHORS)
    out = jax.block_until_ready(out)

    # Pure-JAX reference of the PyTorch semantics.
    ref = jnp.einsum("nchw,oc->nohw", x, weight) + bias[None, :, None, None]
    ref = jnp.transpose(ref, (0, 2, 3, 1)).reshape(N, H * W * NUM_ANCHORS, 6)

    assert out.shape == (N, H * W * NUM_ANCHORS, 6)
    assert jnp.allclose(out, ref, atol=1e-5, rtol=1e-5)
    print("KERNEL_OK")
</pallas_src>

<mosaic_0001>
module attributes {stable_mosaic.version = 11 : i64} {
  func.func @_conv1x1_nchw_to_nhwc_kernel(%arg0: i32, %arg1: i32, %arg2: memref<1x32x256xf32, #tpu.memory_space<vmem>>, %arg3: memref<24x32xf32, #tpu.memory_space<vmem>>, %arg4: memref<24x1xf32, #tpu.memory_space<vmem>>, %arg5: memref<1x256x18xf32, #tpu.memory_space<vmem>>) attributes {dimension_semantics = [#tpu.dimension_semantics<parallel>, #tpu.dimension_semantics<parallel>], iteration_bounds = array<i64: 2, 1>, scalar_prefetch = 0 : i64, scratch_operands = 0 : i64, tpu.core_type = #tpu.core_type<tc>, window_params = [{transform_indices = @transform_0, window_bounds = array<i64: 1, 32, 256>}, {pipeline_mode = #tpu.pipeline_mode<synchronous>, transform_indices = @transform_1, window_bounds = array<i64: 24, 32>}, {pipeline_mode = #tpu.pipeline_mode<synchronous>, transform_indices = @transform_2, window_bounds = array<i64: 24, 1>}, {transform_indices = @transform_3, window_bounds = array<i64: 1, 256, 18>}]} {
    %c0 = arith.constant 0 : index
    %c0_0 = arith.constant 0 : index
    %0 = vector.load %arg3[%c0, %c0_0] : memref<24x32xf32, #tpu.memory_space<vmem>>, vector<24x32xf32>
    %c0_1 = arith.constant 0 : index
    %c0_2 = arith.constant 0 : index
    %1 = vector.load %arg4[%c0_1, %c0_2] : memref<24x1xf32, #tpu.memory_space<vmem>>, vector<24x1xf32>
    %c0_i32 = arith.constant 0 : i32
    %c256_i32 = arith.constant 256 : i32
    %2 = arith.muli %c0_i32, %c256_i32 : i32
    %3 = tpu.assume_multiple %2, 128 : i32
    %c0_3 = arith.constant 0 : index
    %c0_4 = arith.constant 0 : index
    %4 = arith.index_cast %3 : i32 to index
    %5 = vector.load %arg2[%c0_3, %c0_4, %4] : memref<1x32x256xf32, #tpu.memory_space<vmem>>, vector<1x32x256xf32>
    %6 = vector.shape_cast %5 : vector<1x32x256xf32> to vector<32x256xf32>
    %cst = arith.constant dense<0.000000e+00> : vector<24x256xf32>
    %7 = tpu.matmul %0, %6, %cst {dimension_numbers = #tpu.dot_dimension_numbers<[1], [0], [0], [1], [0, 0, 1, 1], [], []>} : vector<24x32xf32>, vector<32x256xf32>, vector<24x256xf32> -> vector<24x256xf32>
    %8 = vector.broadcast %1 : vector<24x1xf32> to vector<24x256xf32>
    %9 = arith.addf %7, %8 : vector<24x256xf32>
    %10 = tpu.transpose %9, [1, 0] : vector<24x256xf32> -> vector<256x24xf32>
    %11 = vector.extract_strided_slice %10 {offsets = [0, 0], sizes = [256, 18], strides = [1, 1]} : vector<256x24xf32> to vector<256x18xf32>
    %c0_5 = arith.constant 0 : index
    %12 = arith.index_cast %3 : i32 to index
    %c0_6 = arith.constant 0 : index
    %13 = vector.load %arg5[%c0_5, %12, %c0_6] : memref<1x256x18xf32, #tpu.memory_space<vmem>>, vector<1x256x18xf32>
    %14 = vector.shape_cast %13 : vector<1x256x18xf32> to vector<256x18xf32>
    %15 = vector.shape_cast %11 : vector<256x18xf32> to vector<1x256x18xf32>
    tpu.vector_store %arg5[%c0_5, %12, %c0_6], %15 {strides = array<i32>} : memref<1x256x18xf32, #tpu.memory_space<vmem>>, vector<1x256x18xf32>,
    %c1_i32 = arith.constant 1 : i32
    return
  }
  func.func @transform_0(%arg0: i32, %arg1: i32) -> (i32, i32, i32) {
    %c0_i32 = arith.constant 0 : i32
    %c0_i32_0 = arith.constant 0 : i32
    return %arg0, %c0_i32, %arg1 : i32, i32, i32
  }
  func.func @transform_1(%arg0: i32, %arg1: i32) -> (i32, i32) {
    %c0_i32 = arith.constant 0 : i32
    %c0_i32_0 = arith.constant 0 : i32
    %c0_i32_1 = arith.constant 0 : i32
    return %c0_i32, %c0_i32_0 : i32, i32
  }
  func.func @transform_2(%arg0: i32, %arg1: i32) -> (i32, i32) {
    %c0_i32 = arith.constant 0 : i32
    %c0_i32_0 = arith.constant 0 : i32
    %c0_i32_1 = arith.constant 0 : i32
    return %c0_i32, %c0_i32_0 : i32, i32
  }
  func.func @transform_3(%arg0: i32, %arg1: i32) -> (i32, i32, i32) {
    %c0_i32 = arith.constant 0 : i32
    %c0_i32_0 = arith.constant 0 : i32
    return %arg0, %arg1, %c0_i32 : i32, i32, i32
  }
}

</mosaic_0001>

<llo_original>
// kernel: hpe_head_forward.1
$region0: #{hpe_head_forward.1}
  #allocation0 [shape = 'u32[]', space=smem, size = 0x4, offset = 0x4, fixed_abs, tag = 'smem constant byte address 0x4 - core index']
  #allocation1 [shape = 'u32[144,128]{1,0:T(1,128)}', space=vmem, size = 0x12000, scoped, tag = 'internal scratch']
  %s0 = inlined_call_operand.vmem [shape: f32[2,32,256], index: 0, kind: input, shape index: {}]
  %s1 = inlined_call_operand.vmem [shape: f32[24,32], index: 1, kind: input, shape index: {}]
  %s2 = inlined_call_operand.vmem [shape: f32[24,1], index: 2, kind: input, shape index: {}]
  %s3 = inlined_call_operand.vmem [shape: f32[2,256,18], index: 3, kind: output, shape index: {}]
  %s4 = sld [smem:[#allocation0]]
  $region45: #{hpe_head_forward.1} parent=0
    _
  %s6 = ssub.s32 1, %s4
  %s7 = scalar_select 0, %s6, %s4
  loop: start=0, step=1, limit=4
  $region2: #{hpe_head_forward.1} parent=0 // loop_pre_header
    _
  $region3: #{hpe_head_forward.1} parent=0 // loop_header
    %s9 = sphi 0, %s13
    %p10 = scmp.ge.s32.totalorder %s9, 4
    %s16 = sphi 0, %s28
    %s17 = sphi 0, %s24
    %s18 = sphi 0, %s16
    %s19 = sphi 0, %s17
    %s20 = sphi 0, %s18
    %s21 = sphi 0, %s19
    %s33 = sphi 0, %s35
    %s36 = sphi 0, %s33
    %s37 = sphi 0, %s36
    %s53 = sphi 0, %s37
    %s57 = sphi 0, %s57
    %s59 = sphi 0, %s57
    %s60 = sphi 0, %s59
    %s74 = sphi 0, %s60
    %s78 = sphi 0, %s78
    %s80 = sphi 0, %s78
    %s81 = sphi 0, %s80
    %s95 = sphi 0, %s81
    %s103 = sphi 0, %s105
    %s106 = sphi 0, %s103
    %s107 = sphi 0, %s106
    %s123 = sphi 0, %s107
  $region4: #{hpe_head_forward.1} parent=0 // loop_header_branch
    %12 = sbr.rel (%p10) target = $region8
  $region5: #{hpe_head_forward.1} parent=0 // loop_body
    %s14 = ssub.s32 %s9, 1
    %s15 = ssub.s32 %s9, 2
    %s22 = sadd.s32 1, %s17
    %p23 = scmp.ge.s32.totalorder %s22, 1
    %s24 = scalar_select %p23, 0, %s22
    %s25 = sadd.s32 1, %s16
    %s26 = scalar_select %p23, %s25, %s16
    %p27 = scmp.ge.s32.totalorder %s26, 2
    %s28 = scalar_select %p27, 0, %s26
    %s29 = ssub.s32 %s16, %s28
    %s30 = ssub.s32 %s17, %s24
    %s31 = sor.u32 %s29, %s30
    %p32 = scmp.eq.s32.totalorder %s31, 0
    %s34 = sadd.s32 %s33, 1
    %s35 = scalar_select %p32, %s33, %s34
    %p38 = pneg %p32
    %p39 = scmp.eq.s32.totalorder %s9, 1
    %p40 = por %p38, %p39
    %p41 = scmp.ne.s32.totalorder %s33, %s36
    %p42 = scmp.eq.s32.totalorder %s9, 0
    %p43 = por %p41, %p42
    %p44 = scmp.ne.s32.totalorder %s33, %s36
    %p45 = scmp.eq.s32.totalorder %s14, 1
    %p46 = por %p44, %p45
    %p47 = scmp.ne.s32.totalorder %s36, %s37
    %p48 = scmp.eq.s32.totalorder %s14, 0
    %p49 = por %p47, %p48
    %p50 = scmp.ne.s32.totalorder %s36, %s37
    %p51 = scmp.eq.s32.totalorder %s15, 1
    %p52 = por %p50, %p51
    %p54 = scmp.ne.s32.totalorder %s37, %s53
    %p55 = scmp.eq.s32.totalorder %s15, 0
    %p56 = por %p54, %p55
    %s58 = sadd.s32 %s57, 1
    %p61 = scmp.eq.s32.totalorder %s9, 1
    %p62 = scmp.ne.s32.totalorder %s57, %s59
    %p63 = scmp.eq.s32.totalorder %s9, 0
    %p64 = por %p62, %p63
    %p65 = scmp.ne.s32.totalorder %s57, %s59
    %p66 = scmp.eq.s32.totalorder %s14, 1
    %p67 = por %p65, %p66
    %p68 = scmp.ne.s32.totalorder %s59, %s60
    %p69 = scmp.eq.s32.totalorder %s14, 0
    %p70 = por %p68, %p69
    %p71 = scmp.ne.s32.totalorder %s59, %s60
    %p72 = scmp.eq.s32.totalorder %s15, 1
    %p73 = por %p71, %p72
    %p75 = scmp.ne.s32.totalorder %s60, %s74
    %p76 = scmp.eq.s32.totalorder %s15, 0
    %p77 = por %p75, %p76
    %s79 = sadd.s32 %s78, 1
    %p82 = scmp.eq.s32.totalorder %s9, 1
    %p83 = scmp.ne.s32.totalorder %s78, %s80
    %p84 = scmp.eq.s32.totalorder %s9, 0
    %p85 = por %p83, %p84
    %p86 = scmp.ne.s32.totalorder %s78, %s80
    %p87 = scmp.eq.s32.totalorder %s14, 1
    %p88 = por %p86, %p87
    %p89 = scmp.ne.s32.totalorder %s80, %s81
    %p90 = scmp.eq.s32.totalorder %s14, 0
    %p91 = por %p89, %p90
    %p92 = scmp.ne.s32.totalorder %s80, %s81
    %p93 = scmp.eq.s32.totalorder %s15, 1
    %p94 = por %p92, %p93
    %p96 = scmp.ne.s32.totalorder %s81, %s95
    %p97 = scmp.eq.s32.totalorder %s15, 0
    %p98 = por %p96, %p97
    %s99 = ssub.s32 %s16, %s28
    %s100 = ssub.s32 %s17, %s24
    %s101 = sor.u32 %s99, %s100
    %p102 = scmp.eq.s32.totalorder %s101, 0
    %s104 = sadd.s32 %s103, 1
    %s105 = scalar_select %p102, %s103, %s104
    %p108 = pneg %p102
    %p109 = scmp.eq.s32.totalorder %s9, 1
    %p110 = por %p108, %p109
    %p111 = scmp.ne.s32.totalorder %s103, %s106
    %p112 = scmp.eq.s32.totalorder %s9, 0
    %p113 = por %p111, %p112
    %p114 = scmp.ne.s32.totalorder %s103, %s106
    %p115 = scmp.eq.s32.totalorder %s14, 1
    %p116 = por %p114, %p115
    %p117 = scmp.ne.s32.totalorder %s106, %s107
    %p118 = scmp.eq.s32.totalorder %s14, 0
    %p119 = por %p117, %p118
    %p120 = scmp.ne.s32.totalorder %s106, %s107
    %p121 = scmp.eq.s32.totalorder %s15, 1
    %p122 = por %p120, %p121
    %p124 = scmp.ne.s32.totalorder %s107, %s123
    %p125 = scmp.eq.s32.totalorder %s15, 0
    %p126 = por %p124, %p125
    %p127 = scmp.le.s32.totalorder 1, %s9
    %p128 = scmp.lt.s32.totalorder %s9, 3
    %p129 = pnand %p127, %p128
    %p130 = pneg %p129
    // Predicated region
    $region9: #{hpe_head_forward.1} parent=5 // pred_check
      _
    $region10: #{hpe_head_forward.1} parent=5 // pred_check_branch
      %132 = sbr.rel (%p129) target = $region12
    $region11: #{hpe_head_forward.1} parent=5 // pred_region
      %s133 = ssub.s32 %s9, 1
      // Predicated region
      $region13: #{hpe_head_forward.1} parent=11 // pred_check
        %p134 = pneg %p70
      $region14: #{hpe_head_forward.1} parent=11 // pred_check_branch
        %136 = sbr.rel (%p134) target = $region16
      $region15: #{hpe_head_forward.1} parent=11 // pred_region
        _
      $region16: #{hpe_head_forward.1} parent=11 // pred_fallthru
        _
      // Predicated region
      $region17: #{hpe_head_forward.1} parent=11 // pred_check
        %p137 = pneg %p91
      $region18: #{hpe_head_forward.1} parent=11 // pred_check_branch
        %139 = sbr.rel (%p137) target = $region20
      $region19: #{hpe_head_forward.1} parent=11 // pred_region
        _
      $region20: #{hpe_head_forward.1} parent=11 // pred_fallthru
        _
    $region12: #{hpe_head_forward.1} parent=5 // pred_fallthru
      _
    %p140 = scmp.lt.s32.totalorder %s9, 2
    // Predicated region
    $region21: #{hpe_head_forward.1} parent=5 // pred_check
      %p141 = pneg %p140
    $region22: #{hpe_head_forward.1} parent=5 // pred_check_branch
      %143 = sbr.rel (%p141) target = $region24
    $region23: #{hpe_head_forward.1} parent=5 // pred_region
      // Predicated region
      $region25: #{hpe_head_forward.1} parent=23 // pred_check
        %p144 = pneg %p43
      $region26: #{hpe_head_forward.1} parent=23 // pred_check_branch
        %146 = sbr.rel (%p144) target = $region28
      $region27: #{hpe_head_forward.1} parent=23 // pred_region
        %s147 = smul.u32 2, %s17
        %p148 = scmp.lt.s32.totalorder %s16, 1
        %s149 = scalar_select %p148, %s16, 1
        %p150 = scmp.lt.s32.totalorder %s147, 1
        %s151 = scalar_select %p150, %s147, 1
        %s152 = smul.addr %s149, 8
        %s153 = sadd.s32 %s151, %s152
        %s154 = smul.addr %s153, 8
        %s155 = scalar_lea.vmem %s0, %s154
        %s156 = smul.u32 2, %s17
      $region28: #{hpe_head_forward.1} parent=23 // pred_fallthru
        _
    $region24: #{hpe_head_forward.1} parent=5 // pred_fallthru
      _
    %p157 = scmp.le.s32.totalorder 1, %s9
    %p158 = scmp.lt.s32.totalorder %s9, 3
    %p159 = pnand %p157, %p158
    %p160 = pneg %p159
    // Predicated region
    $region29: #{hpe_head_forward.1} parent=5 // pred_check
      _
    $region30: #{hpe_head_forward.1} parent=5 // pred_check_branch
      %162 = sbr.rel (%p159) target = $region32
    $region31: #{hpe_head_forward.1} parent=5 // pred_region
      %s163 = ssub.s32 %s9, 1
      %s164 = smul.u32 2, %s19
      %p165 = scmp.lt.s32.totalorder %s18, 1
      %s166 = scalar_select %p165, %s18, 1
      %p167 = scmp.lt.s32.totalorder %s164, 1
      %s168 = scalar_select %p167, %s164, 1
      %s169 = smul.addr %s166, 8
      %s170 = sadd.s32 %s168, %s169
      %s171 = smul.addr %s170, 8
      %s172 = scalar_lea.vmem %s0, %s171
      %p173 = pneg %p49
      %p174 = pneg %p46
      %p175 = pneg %p70
      %p176 = pneg %p67
      %p177 = pneg %p91
      %p178 = pneg %p88
      %p179 = pneg %p119
      %p180 = pneg %p116
      %s181 = smul.u32 32, %s19
      %p182 = scmp.lt.s32.totalorder %s18, 1
      %s183 = scalar_select %p182, %s18, 1
      %p184 = scmp.lt.s32.totalorder %s181, 31
      %s185 = scalar_select %p184, %s181, 31
      %s186 = smul.addr %s183, 32
      %s187 = sadd.s32 %s185, %s186
      %s188 = smul.addr %s187, 8
      %s189 = scalar_lea.vmem %s3, %s188
      %s190 = smul.u32 2, %s19
      %p191 = scmp.lt.s32.totalorder %s18, 1
      %s192 = scalar_select %p191, %s18, 1
      %p193 = scmp.lt.s32.totalorder %s190, 1
      %s194 = scalar_select %p193, %s190, 1
      %s195 = smul.addr %s192, 8
      %s196 = sadd.s32 %s194, %s195
      %s197 = smul.addr %s196, 8
      %s198 = scalar_lea.vmem %s0, %s197
      %s199 = smul.u32 2, %s19
      %s200 = smul.u32 32, %s19
      %p201 = scmp.lt.s32.totalorder %s18, 1
      %s202 = scalar_select %p201, %s18, 1
      %p203 = scmp.lt.s32.totalorder %s200, 31
      %s204 = scalar_select %p203, %s200, 31
      %s205 = smul.addr %s202, 32
      %s206 = sadd.s32 %s204, %s205
      %s207 = smul.addr %s206, 8
      %s208 = scalar_lea.vmem %s3, %s207
      %s209 = smul.u32 32, %s19
      %v210 = vld [vmem:[%s1] sm:$0xff]
      %v211 = vld [vmem:[%s1 + $0x8] sm:$0xff]
      %v212 = vld [vmem:[%s1 + $0x10] sm:$0xff]
      %v213 = vld [vmem:[%s2] sm:$0xff]
      %v214 = vld [vmem:[%s2 + $0x8] sm:$0xff]
      %v215 = vld [vmem:[%s2 + $0x10] sm:$0xff]
      %v216 = vld [vmem:[%s198] sm:$0xff]
      %v217 = vld [vmem:[%s198 + $0x8] sm:$0xff]
      %v218 = vld [vmem:[%s198 + $0x10] sm:$0xff]
      %v219 = vld [vmem:[%s198 + $0x18] sm:$0xff]
      %v220 = vld [vmem:[%s198 + $0x20] sm:$0xff]
      %v221 = vld [vmem:[%s198 + $0x28] sm:$0xff]
      %v222 = vld [vmem:[%s198 + $0x30] sm:$0xff]
      %v223 = vld [vmem:[%s198 + $0x38] sm:$0xff]
      %225 = vset.pattern.permute.xlu0 0
      %226 = vperm.xlu0 %225, %v213
      %v227 = vpop.permute.xlu0 %226
      %230 = vset.pattern.permute.xlu0 0
      %231 = vperm.xlu0 %230, %v214
      %v232 = vpop.permute.xlu0 %231
      %235 = vset.pattern.permute.xlu0 0
      %236 = vperm.xlu0 %235, %v215
      %v237 = vpop.permute.xlu0 %236
      %vm239 = vcmask 261120
      %v241 = vsel %vm239, %v210, 0
      %v244 = vsel %vm239, %v211, 0
      %v247 = vsel %vm239, %v212, 0
      %249 = vmatprep.subr.mxu0 %v217
      %250 = vmatpush1.msra.mxu0 %v216
      %251 = vmatprep.subr.mxu0 %v219
      %252 = vmatpush1.msra.mxu0 %v218
      %253 = vmatprep.subr.mxu0 %v221
      %254 = vmatpush1.msra.mxu0 %v220
      %255 = vmatprep.subr.mxu0 %v223
      %256 = vmatpush1.msra.mxu0 %v222
      %257 = vmatprep.subr.mxu0 0.0
      %258 = vmatpush1.msra.mxu0 0.0
      %259 = vmatprep.subr.mxu0 0.0
      %260 = vmatpush1.msra.mxu0 0.0
      %261 = vmatprep.subr.mxu0 0.0
      %262 = vmatpush1.msra.mxu0 0.0
      %263 = vmatprep.subr.mxu0 0.0
      %264 = vmatpush1.msra.mxu0 0.0
      %265 = vmatprep.subr.mxu0 0.0
      %266 = vmatpush1.msra.mxu0 0.0
      %267 = vmatprep.subr.mxu0 0.0
      %268 = vmatpush1.msra.mxu0 0.0
      %269 = vmatprep.subr.mxu0 0.0
      %270 = vmatpush1.msra.mxu0 0.0
      %271 = vmatprep.subr.mxu0 0.0
      %272 = vmatpush1.msra.mxu0 0.0
      %273 = vmatprep.subr.mxu0 0.0
      %274 = vmatpush1.msra.mxu0 0.0
      %275 = vmatprep.subr.mxu0 0.0
      %276 = vmatpush1.msra.mxu0 0.0
      %277 = vmatprep.subr.mxu0 0.0
      %278 = vmatpush1.msra.mxu0 0.0
      %279 = vmatprep.subr.mxu0 0.0
      %280 = vmatpush1.msra.mxu0 0.0
      %281 = vmatprep.subr.mxu0 0.0
      %282 = vmatpush1.msra.mxu0 0.0
      %283 = vmatprep.subr.mxu0 0.0
      %284 = vmatpush1.msra.mxu0 0.0
      %285 = vmatprep.subr.mxu0 0.0
      %286 = vmatpush1.msra.mxu0 0.0
      %287 = vmatprep.subr.mxu0 0.0
      %288 = vmatpush1.msra.mxu0 0.0
      %289 = vmatprep.subr.mxu0 0.0
      %290 = vmatpush1.msra.mxu0 0.0
      %291 = vmatprep.subr.mxu0 0.0
      %292 = vmatpush1.msra.mxu0 0.0
      %293 = vmatprep.subr.mxu0 0.0
      %294 = vmatpush1.msra.mxu0 0.0
      %295 = vmatprep.subr.mxu0 0.0
      %296 = vmatpush1.msra.mxu0 0.0
      %297 = vmatprep.subr.mxu0 0.0
      %298 = vmatpush1.msra.mxu0 0.0
      %299 = vmatprep.subr.mxu0 0.0
      %300 = vmatpush1.msra.mxu0 0.0
      %301 = vmatprep.subr.mxu0 0.0
      %302 = vmatpush1.msra.mxu0 0.0
      %303 = vmatprep.subr.mxu0 0.0
      %304 = vmatpush1.msra.mxu0 0.0
      %305 = vmatprep.subr.mxu0 0.0
      %306 = vmatpush1.msra.mxu0 0.0
      %307 = vmatprep.subr.mxu0 0.0
      %308 = vmatpush1.msra.mxu0 0.0
      %309 = vmatprep.subr.mxu0 0.0
      %310 = vmatpush1.msra.mxu0 0.0
      %311 = vmatprep.subr.mxu0 0.0
      %312 = vmatpush1.msra.mxu0 0.0
      %313 = vmatprep.mubr.f32.mxu0 0.0
      %314 = vmatmul.mubr.f32.gmra.mrb[0].mxu0 %v241
      %v315 = vpop.f32.mrb[0].mxu0
      %v316 = vadd.f32 %v227, %v315
      %v317 = vpop.f32.mrb[0].mxu0
      %v318 = vadd.f32 %v227, %v317
      %319 = vmatprep.mubr.f32.mxu0 0.0
      %320 = vmatmul.mubr.f32.gmra.mrb[0].mxu0 %v244
      %v321 = vpop.f32.mrb[0].mxu0
      %v322 = vadd.f32 %v232, %v321
      %v323 = vpop.f32.mrb[0].mxu0
      %v324 = vadd.f32 %v232, %v323
      %325 = vmatprep.mubr.f32.mxu0 0.0
      %326 = vmatmul.mubr.f32.gmra.mrb[0].mxu0 %v247
      %v327 = vpop.f32.mrb[0].mxu0
      %v328 = vadd.f32 %v237, %v327
      %v329 = vpop.f32.mrb[0].mxu0
      %v330 = vadd.f32 %v237, %v329
      %331 = vdwg.mxu0
      %332 = vxpose.xlu0.b32.start [1/16] %v316, 128
      %333 = vxpose.xlu0.b32.cont [2/16] %v322, 128
      %334 = vxpose.xlu0.b32.cont [3/16] %v328, 128
      %335 = vxpose.xlu0.b32.cont [4/16] 0.0, 128
      %336 = vxpose.xlu0.b32.cont [5/16] 0.0, 128
      %337 = vxpose.xlu0.b32.cont [6/16] 0.0, 128
      %338 = vxpose.xlu0.b32.cont [7/16] 0.0, 128
      %339 = vxpose.xlu0.b32.cont [8/16] 0.0, 128
      %340 = vxpose.xlu0.b32.cont [9/16] 0.0, 128
      %341 = vxpose.xlu0.b32.cont [10/16] 0.0, 128
      %342 = vxpose.xlu0.b32.cont [11/16] 0.0, 128
      %343 = vxpose.xlu0.b32.cont [12/16] 0.0, 128
      %344 = vxpose.xlu0.b32.cont [13/16] 0.0, 128
      %345 = vxpose.xlu0.b32.cont [14/16] 0.0, 128
      %346 = vxpose.xlu0.b32.cont [15/16] 0.0, 128
      %347 = vxpose.xlu0.b32.end [16/16] 0.0, 128
      %v348 = vpop.trf.xlu0
      %v349 = vpop.trf.xlu0
      %v350 = vpop.trf.xlu0
      %v351 = vpop.trf.xlu0
      %v352 = vpop.trf.xlu0
      %v353 = vpop.trf.xlu0
      %v354 = vpop.trf.xlu0
      %v355 = vpop.trf.xlu0
      %v356 = vpop.trf.xlu0
      %v357 = vpop.trf.xlu0
      %v358 = vpop.trf.xlu0
      %v359 = vpop.trf.xlu0
      %v360 = vpop.trf.xlu0
      %v361 = vpop.trf.xlu0
      %v362 = vpop.trf.xlu0
      %v363 = vpop.trf.xlu0
      %364 = vxpose.xlu0.b32.start [1/16] %v318, 128
      %365 = vxpose.xlu0.b32.cont [2/16] %v324, 128
      %366 = vxpose.xlu0.b32.cont [3/16] %v330, 128
      %367 = vxpose.xlu0.b32.cont [4/16] 0.0, 128
      %368 = vxpose.xlu0.b32.cont [5/16] 0.0, 128
      %369 = vxpose.xlu0.b32.cont [6/16] 0.0, 128
      %370 = vxpose.xlu0.b32.cont [7/16] 0.0, 128
      %371 = vxpose.xlu0.b32.cont [8/16] 0.0, 128
      %372 = vxpose.xlu0.b32.cont [9/16] 0.0, 128
      %373 = vxpose.xlu0.b32.cont [10/16] 0.0, 128
      %374 = vxpose.xlu0.b32.cont [11/16] 0.0, 128
      %375 = vxpose.xlu0.b32.cont [12/16] 0.0, 128
      %376 = vxpose.xlu0.b32.cont [13/16] 0.0, 128
      %377 = vxpose.xlu0.b32.cont [14/16] 0.0, 128
      %378 = vxpose.xlu0.b32.cont [15/16] 0.0, 128
      %379 = vxpose.xlu0.b32.end [16/16] 0.0, 128
      %v380 = vpop.trf.xlu0
      %v381 = vpop.trf.xlu0
      %v382 = vpop.trf.xlu0
      %v383 = vpop.trf.xlu0
      %v384 = vpop.trf.xlu0
      %v385 = vpop.trf.xlu0
      %v386 = vpop.trf.xlu0
      %v387 = vpop.trf.xlu0
      %v388 = vpop.trf.xlu0
      %v389 = vpop.trf.xlu0
      %v390 = vpop.trf.xlu0
      %v391 = vpop.trf.xlu0
      %v392 = vpop.trf.xlu0
      %v393 = vpop.trf.xlu0
      %v394 = vpop.trf.xlu0
      %v395 = vpop.trf.xlu0
      %vm396 = vcmask 146432
      %397 = vst.msk [vmem:[%s208] sm:$0xff] %vm396, %v348
      %398 = vst.msk [vmem:[%s208 + $0x8] sm:$0xff] %vm396, %v349
      %399 = vst.msk [vmem:[%s208 + $0x10] sm:$0xff] %vm396, %v350
      %400 = vst.msk [vmem:[%s208 + $0x18] sm:$0xff] %vm396, %v351
      %401 = vst.msk [vmem:[%s208 + $0x20] sm:$0xff] %vm396, %v352
      %402 = vst.msk [vmem:[%s208 + $0x28] sm:$0xff] %vm396, %v353
      %403 = vst.msk [vmem:[%s208 + $0x30] sm:$0xff] %vm396, %v354
      %404 = vst.msk [vmem:[%s208 + $0x38] sm:$0xff] %vm396, %v355
      %405 = vst.msk [vmem:[%s208 + $0x40] sm:$0xff] %vm396, %v356
      %406 = vst.msk [vmem:[%s208 + $0x48] sm:$0xff] %vm396, %v357
      %407 = vst.msk [vmem:[%s208 + $0x50] sm:$0xff] %vm396, %v358
      %408 = vst.msk [vmem:[%s208 + $0x58] sm:$0xff] %vm396, %v359
      %409 = vst.msk [vmem:[%s208 + $0x60] sm:$0xff] %vm396, %v360
      %410 = vst.msk [vmem:[%s208 + $0x68] sm:$0xff] %vm396, %v361
      %411 = vst.msk [vmem:[%s208 + $0x70] sm:$0xff] %vm396, %v362
      %412 = vst.msk [vmem:[%s208 + $0x78] sm:$0xff] %vm396, %v363
      %413 = vst.msk [vmem:[%s208 + $0x80] sm:$0xff] %vm396, %v380
      %414 = vst.msk [vmem:[%s208 + $0x88] sm:$0xff] %vm396, %v381
      %415 = vst.msk [vmem:[%s208 + $0x90] sm:$0xff] %vm396, %v382
      %416 = vst.msk [vmem:[%s208 + $0x98] sm:$0xff] %vm396, %v383
      %417 = vst.msk [vmem:[%s208 + $0xa0] sm:$0xff] %vm396, %v384
      %418 = vst.msk [vmem:[%s208 + $0xa8] sm:$0xff] %vm396, %v385
      %419 = vst.msk [vmem:[%s208 + $0xb0] sm:$0xff] %vm396, %v386
      %420 = vst.msk [vmem:[%s208 + $0xb8] sm:$0xff] %vm396, %v387
      %421 = vst.msk [vmem:[%s208 + $0xc0] sm:$0xff] %vm396, %v388
      %422 = vst.msk [vmem:[%s208 + $0xc8] sm:$0xff] %vm396, %v389
      %423 = vst.msk [vmem:[%s208 + $0xd0] sm:$0xff] %vm396, %v390
      %424 = vst.msk [vmem:[%s208 + $0xd8] sm:$0xff] %vm396, %v391
      %425 = vst.msk [vmem:[%s208 + $0xe0] sm:$0xff] %vm396, %v392
      %426 = vst.msk [vmem:[%s208 + $0xe8] sm:$0xff] %vm396, %v393
      %427 = vst.msk [vmem:[%s208 + $0xf0] sm:$0xff] %vm396, %v394
      %428 = vst.msk [vmem:[%s208 + $0xf8] sm:$0xff] %vm396, %v395
      %s429 = smul.u32 32, %s19
      %p430 = scmp.lt.s32.totalorder %s18, 1
      %s431 = scalar_select %p430, %s18, 1
      %p432 = scmp.lt.s32.totalorder %s429, 31
      %s433 = scalar_select %p432, %s429, 31
      %s434 = smul.addr %s431, 32
      %s435 = sadd.s32 %s433, %s434
      %s436 = smul.addr %s435, 8
      %s437 = scalar_lea.vmem %s3, %s436
      // Predicated region
      $region33: #{hpe_head_forward.1} parent=31 // pred_check
        %p438 = pneg %p116
      $region34: #{hpe_head_forward.1} parent=31 // pred_check_branch
        %440 = sbr.rel (%p438) target = $region36
      $region35: #{hpe_head_forward.1} parent=31 // pred_region
        %s441 = smul.u32 32, %s19
      $region36: #{hpe_head_forward.1} parent=31 // pred_fallthru
        _
    $region32: #{hpe_head_forward.1} parent=5 // pred_fallthru
      _
    %p442 = scmp.le.s32.totalorder 2, %s9
    // Predicated region
    $region37: #{hpe_head_forward.1} parent=5 // pred_check
      %p443 = pneg %p442
    $region38: #{hpe_head_forward.1} parent=5 // pred_check_branch
      %445 = sbr.rel (%p443) target = $region40
    $region39: #{hpe_head_forward.1} parent=5 // pred_region
      %s446 = ssub.s32 %s9, 2
      // Predicated region
      $region41: #{hpe_head_forward.1} parent=39 // pred_check
        %p447 = pneg %p122
      $region42: #{hpe_head_forward.1} parent=39 // pred_check_branch
        %449 = sbr.rel (%p447) target = $region44
      $region43: #{hpe_head_forward.1} parent=39 // pred_region
        %s450 = smul.u32 32, %s21
        %p451 = scmp.lt.s32.totalorder %s20, 1
        %s452 = scalar_select %p451, %s20, 1
        %p453 = scmp.lt.s32.totalorder %s450, 31
        %s454 = scalar_select %p453, %s450, 31
        %s455 = smul.addr %s452, 32
        %s456 = sadd.s32 %s454, %s455
        %s457 = smul.addr %s456, 8
        %s458 = scalar_lea.vmem %s3, %s457
      $region44: #{hpe_head_forward.1} parent=39 // pred_fallthru
        _
    $region40: #{hpe_head_forward.1} parent=5 // pred_fallthru
      _
  $region6: #{hpe_head_forward.1} parent=0 // loop_footer
    %s13 = sadd.s32 1, %s9
  $region7: #{hpe_head_forward.1} parent=0 // loop_footer_branch
    %8 = sbr.rel target = $region3
  $region8: #{hpe_head_forward.1} parent=0 // loop_exit
    _

</llo_original>
